<compile_context>
chip_gen: v7x
topology: tpu7x:2x2x1
jax: 0.10.0
libtpu: 0.0.40
codegen_flags: <defaults>
</compile_context>

<pallas_src>
import functools

import jax
import jax.numpy as jnp
from jax.experimental import pallas as pl
from jax.experimental.pallas import tpu as pltpu


# -----------------------------------------------------------------------------
# Kernels
# -----------------------------------------------------------------------------
def _scale_kernel(x_ref, o_ref, *, scale):
    # Fused residual path: x + Identity(x) (+ x + Identity(x)) == scale * x.
    o_ref[...] = x_ref[...] * scale


def _ln_residual(y, x_ref, g_ref, b_ref, o_ref):
    """LayerNorm over the channel axis (axis 0 of the (C, T) layout) + residual."""
    mu = jnp.mean(y, axis=0, keepdims=True)
    var = jnp.mean((y - mu) * (y - mu), axis=0, keepdims=True)
    yln = (y - mu) * jax.lax.rsqrt(var + 1e-5) * g_ref[...] + b_ref[...]
    x2 = x_ref[...].astype(jnp.float32) * 2.0          # residual: x + Identity(x)
    o_ref[...] = (x2 + yln).astype(o_ref.dtype)


def _decoder_attn_kernel(x_ref, w1_ref, w2_ref, g_ref, b_ref, o_ref):
    # Channels on sublanes (axis 0), spatial positions lane-dense (axis -1).
    # The 2x residual doubling is folded into w1 (w1 = 2 * fc1.weight, bf16).
    xb = x_ref[...].astype(jnp.bfloat16)                                # (C, T)
    h = jnp.dot(w1_ref[...], xb, preferred_element_type=jnp.float32)   # (Hd, T)
    h = jax.nn.gelu(h, approximate=False)                               # exact erf GELU
    y = jnp.dot(w2_ref[...], h.astype(jnp.bfloat16),
                preferred_element_type=jnp.float32)                     # (C, T)
    _ln_residual(y, x_ref, g_ref, b_ref, o_ref)


def _decoder_attn_kernel_hd_split(x_ref, w1_ref, w2_ref, g_ref, b_ref, o_ref,
                                  acc_ref):
    # Same computation with the hidden dim tiled on the last ('arbitrary') grid
    # axis; partial fc2 products accumulate into a (C, T) f32 scratch.
    k = pl.program_id(2)

    @pl.when(k == 0)
    def _():
        acc_ref[...] = jnp.zeros_like(acc_ref)

    xb = x_ref[...].astype(jnp.bfloat16)                                # (C, T)
    h = jnp.dot(w1_ref[...], xb, preferred_element_type=jnp.float32)   # (thd, T)
    h = jax.nn.gelu(h, approximate=False)
    acc_ref[...] += jnp.dot(w2_ref[...], h.astype(jnp.bfloat16),
                            preferred_element_type=jnp.float32)         # (C, T)

    @pl.when(k == pl.num_programs(2) - 1)
    def _():
        _ln_residual(acc_ref[...], x_ref, g_ref, b_ref, o_ref)


# -----------------------------------------------------------------------------
# Tiling helpers
# -----------------------------------------------------------------------------
def _buffered_kwargs(n):
    """pipeline_mode=pl.Buffered(n) kwargs if this jax supports it, else {}."""
    if hasattr(pl, "Buffered"):
        try:
            pl.BlockSpec((8, 128), lambda i: (0, 0), pipeline_mode=pl.Buffered(n))
            return dict(pipeline_mode=pl.Buffered(n))
        except TypeError:
            pass
    return {}


def _divisors_desc(total, align=128, cap=None):
    """Multiples of `align` that divide `total`, descending (possibly empty)."""
    out = []
    t = total if cap is None else min(total, cap)
    t -= t % align
    while t >= align:
        if total % t == 0:
            out.append(t)
        t -= align
    return out


def _attn_vmem_estimate(C, thw, thd, wbuf):
    """Rough per-step VMEM working set for the attention-branch kernel."""
    f32, bf16 = 4, 2
    act = 2 * 2 * C * thw * f32           # double-buffered input + output tiles
    acc = C * thw * f32                   # f32 accumulator (split path) / slack
    h = thd * thw * (f32 + bf16)          # fc1 output (f32) + bf16 copy for fc2
    w = wbuf * 2 * thd * C * bf16         # fc1 + fc2 bf16 weight slabs
    return act + acc + h + w


def _pick_attn_tiles(B, C, HW, Hd, *, budget_bytes=16 << 20, weight_budget=8 << 20):
    # Hidden tile: keep both bf16 weight slabs under ~8 MiB (v7x VMEM headroom);
    # must be a multiple of 128 dividing Hd, or Hd itself.
    thd = Hd
    if 2 * Hd * C * 2 > weight_budget:
        cands = _divisors_desc(Hd, 128)
        if cands:
            thd = cands[-1]
            for c in cands:
                if 2 * c * C * 2 <= weight_budget:
                    thd = c
                    break
    # Spatial tile: largest multiple of 128 dividing HW within the VMEM budget;
    # if B == 1 prefer tiles giving >= 2 grid steps (keep both v7x TCs busy).
    cands = _divisors_desc(HW, 128) or [HW]
    if B == 1:
        multi = [c for c in cands if HW // c >= 2]
        if multi:
            cands = multi
    wbuf = 1 if thd == Hd else 2
    thw = cands[-1]
    for c in cands:
        if _attn_vmem_estimate(C, c, thd, wbuf) <= budget_bytes:
            thw = c
            break
    return thw, thd


# -----------------------------------------------------------------------------
# Wrappers
# -----------------------------------------------------------------------------
def scale_pallas(x, scale):
    """Elementwise scale*x, lane-dense tiled over a flattened 2-D view."""
    kern = functools.partial(_scale_kernel, scale=scale)
    total = x.size
    lane = next((c for c in (1024, 512, 256, 128) if total % c == 0), None)
    flat = x.reshape(-1)
    pad = 0
    if lane is None:
        # Oddly sized input: pad to a lane multiple so every store stays lane-dense.
        lane = 128
        pad = (-total) % lane
        flat = jnp.pad(flat, (0, pad))
    rows = flat.size // lane
    # Byte-budget-derived row tile (~4 MiB per block), multiple of 8 sublanes.
    itemsize = jnp.dtype(x.dtype).itemsize
    cand = max(8, ((4 << 20) // (lane * itemsize)) // 8 * 8)
    tr = min(rows, cand)
    x2d = flat.reshape(rows, lane)
    out2d = pl.pallas_call(
        kern,
        out_shape=jax.ShapeDtypeStruct((rows, lane), x.dtype),
        grid=(pl.cdiv(rows, tr),),
        in_specs=[pl.BlockSpec((tr, lane), lambda i: (i, 0))],
        out_specs=pl.BlockSpec((tr, lane), lambda i: (i, 0)),
        compiler_params=pltpu.CompilerParams(dimension_semantics=("parallel",)),
    )(x2d)
    out = out2d.reshape(-1)
    if pad:
        out = out[:total]
    return out.reshape(x.shape)


def init_decoder_params(key, dim, mlp_ratio=4):
    """Deterministic synthetic init of the DecoderBlocks' Mlp (Cblock) params."""
    hidden = int(mlp_ratio * dim)
    k1, k2 = jax.random.split(key)
    # fc1.weight: (hidden, dim); fc2.weight: (dim, hidden); bias=False in both.
    fc1_w = jax.random.normal(k1, (hidden, dim), jnp.float32) * 0.05
    fc2_w = jax.random.normal(k2, (dim, hidden), jnp.float32) * 0.05
    ln_w = jnp.ones((dim,), jnp.float32)            # nn.LayerNorm default affine
    ln_b = jnp.zeros((dim,), jnp.float32)
    return dict(
        fc1_w=fc1_w, fc2_w=fc2_w, ln_w=ln_w, ln_b=ln_b,
        # Kernel-side copies prepared ONCE: bf16 weights (native MXU rate, half
        # the VMEM / DMA bytes).  The residual doubling x2 = 2*x is folded into
        # fc1's weights so the kernel feeds x straight to the MXU in bf16.
        fc1_w2x_kern=(2.0 * fc1_w).astype(jnp.bfloat16),   # (Hd, C)
        fc2_w_kern=fc2_w.astype(jnp.bfloat16),             # (C, Hd)
        ln_w_kern=ln_w.reshape(dim, 1),
        ln_b_kern=ln_b.reshape(dim, 1),
    )


def _attn_call(x3, params, B, C, HW, Hd, thw, thd, *, single_buffer_consts):
    n_k = Hd // thd
    const_kw = _buffered_kwargs(1) if single_buffer_consts else {}
    w_kw = const_kw if n_k == 1 else {}     # tiled weights keep default buffering
    wbuf = 1 if (n_k == 1 and w_kw) else 2
    est = _attn_vmem_estimate(C, thw, thd, wbuf)
    vmem_limit = int(min(64 << 20, max(32 << 20, 2 * est)))

    if n_k == 1:
        return pl.pallas_call(
            _decoder_attn_kernel,
            out_shape=jax.ShapeDtypeStruct((B, C, HW), x3.dtype),
            grid=(B, HW // thw),
            in_specs=[
                pl.BlockSpec((None, C, thw), lambda b, j: (b, 0, j)),   # activations
                pl.BlockSpec((Hd, C), lambda b, j: (0, 0), **w_kw),     # 2*fc1.w bf16
                pl.BlockSpec((C, Hd), lambda b, j: (0, 0), **w_kw),     # fc2.w bf16
                pl.BlockSpec((C, 1), lambda b, j: (0, 0), **const_kw),  # LN gamma
                pl.BlockSpec((C, 1), lambda b, j: (0, 0), **const_kw),  # LN beta
            ],
            out_specs=pl.BlockSpec((None, C, thw), lambda b, j: (b, 0, j)),
            compiler_params=pltpu.CompilerParams(
                dimension_semantics=("parallel", "parallel"),
                vmem_limit_bytes=vmem_limit),
        )(x3, params["fc1_w2x_kern"], params["fc2_w_kern"],
          params["ln_w_kern"], params["ln_b_kern"])

    # Hidden-dim reduction path (large C: bounds resident VMEM on v7x).
    return pl.pallas_call(
        _decoder_attn_kernel_hd_split,
        out_shape=jax.ShapeDtypeStruct((B, C, HW), x3.dtype),
        grid=(B, HW // thw, n_k),
        in_specs=[
            pl.BlockSpec((None, C, thw), lambda b, j, k: (b, 0, j)),
            pl.BlockSpec((thd, C), lambda b, j, k: (k, 0)),
            pl.BlockSpec((C, thd), lambda b, j, k: (0, k)),
            pl.BlockSpec((C, 1), lambda b, j, k: (0, 0), **const_kw),
            pl.BlockSpec((C, 1), lambda b, j, k: (0, 0), **const_kw),
        ],
        out_specs=pl.BlockSpec((None, C, thw), lambda b, j, k: (b, 0, j)),
        scratch_shapes=[pltpu.VMEM((C, thw), jnp.float32)],
        compiler_params=pltpu.CompilerParams(
            dimension_semantics=("parallel", "parallel", "arbitrary"),
            vmem_limit_bytes=vmem_limit),
    )(x3, params["fc1_w2x_kern"], params["fc2_w_kern"],
      params["ln_w_kern"], params["ln_b_kern"])


def decoder_block_forward(x_nchw, params, *, token_mixer_is_attention=False,
                          hidden_tile=None):
    """DecoderBlocks.forward. x_nchw: (B, C, H, W) float32."""
    if not token_mixer_is_attention:
        # x = x + Identity(x); x = x + Identity(x)  ==>  4 * x, one fused HBM pass.
        return scale_pallas(x_nchw, 4.0)

    B, C, H, W = x_nchw.shape
    HW = H * W
    Hd = params["fc2_w_kern"].shape[1]
    thw, thd = _pick_attn_tiles(B, C, HW, Hd)
    if hidden_tile is not None and Hd % hidden_tile == 0 and \
            (hidden_tile == Hd or hidden_tile % 128 == 0):
        thd = hidden_tile                               # explicit override (testing)
    x3 = x_nchw.reshape(B, C, HW)                       # free reshape, no transpose
    try:
        out3 = _attn_call(x3, params, B, C, HW, Hd, thw, thd,
                          single_buffer_consts=True)
    except Exception:
        # Fallback if single-buffered (pipeline_mode) specs fail to lower here.
        out3 = _attn_call(x3, params, B, C, HW, Hd, thw, thd,
                          single_buffer_consts=False)
    return out3.reshape(B, C, H, W)


# -----------------------------------------------------------------------------
# Pure-JAX reference (f32 everywhere) for verification
# -----------------------------------------------------------------------------
def _decoder_ref(x, params, token_mixer_is_attention=False):
    x2 = x + x
    if not token_mixer_is_attention:
        return x2 + x2
    B, C, H, W = x.shape
    rows = jnp.transpose(x2, (0, 2, 3, 1)).reshape(-1, C)
    h = rows @ params["fc1_w"].T
    h = jax.nn.gelu(h, approximate=False)
    y = h @ params["fc2_w"].T
    mu = y.mean(-1, keepdims=True)
    var = ((y - mu) ** 2).mean(-1, keepdims=True)
    yln = (y - mu) / jnp.sqrt(var + 1e-5) * params["ln_w"] + params["ln_b"]
    yln = jnp.transpose(yln.reshape(B, H, W, C), (0, 3, 1, 2))
    return x2 + yln


# -----------------------------------------------------------------------------
if __name__ == "__main__":
    B, C, H, W = 2, 128, 16, 16          # HW = 256, hidden = 512
    key = jax.random.PRNGKey(0)
    kx, kp = jax.random.split(key)
    x = jax.random.normal(kx, (B, C, H, W), jnp.float32)
    params = init_decoder_params(kp, dim=C)

    # Default DecoderBlocks config (token_mixer = nn.Identity): forward == 4 * x.
    out_default = jax.block_until_ready(decoder_block_forward(x, params))
    ref_default = _decoder_ref(x, params)
    assert out_default.shape == (B, C, H, W)
    assert jnp.allclose(out_default, ref_default, atol=1e-5, rtol=1e-5)

    # Attention-style branch: fused (2x folded into fc1) + Mlp + LN + residual.
    out_attn = jax.block_until_ready(
        decoder_block_forward(x, params, token_mixer_is_attention=True))
    ref_attn = _decoder_ref(x, params, token_mixer_is_attention=True)
    assert out_attn.shape == (B, C, H, W)
    max_err = float(jnp.max(jnp.abs(out_attn - ref_attn)))
    # bf16 MXU matmuls vs. full-f32 reference -> loosened tolerance.
    assert max_err < 5e-2, f"max abs err {max_err}"

    # Also exercise the Hd-reduction (accumulator) path used for large C on v7x.
    out_split = jax.block_until_ready(
        decoder_block_forward(x, params, token_mixer_is_attention=True,
                              hidden_tile=256))
    max_err2 = float(jnp.max(jnp.abs(out_split - ref_attn)))
    assert max_err2 < 5e-2, f"max abs err (Hd-split) {max_err2}"

    print("KERNEL_OK")
</pallas_src>

<mosaic_0001>
module attributes {stable_mosaic.version = 11 : i64} {
  func.func @_scale_kernel(%arg0: i32, %arg1: memref<64x1024xf32, #tpu.memory_space<vmem>>, %arg2: memref<64x1024xf32, #tpu.memory_space<vmem>>) attributes {dimension_semantics = [#tpu.dimension_semantics<parallel>], iteration_bounds = array<i64: 1>, scalar_prefetch = 0 : i64, scratch_operands = 0 : i64, tpu.core_type = #tpu.core_type<tc>, window_params = [{transform_indices = @transform_0, window_bounds = array<i64: 64, 1024>}, {transform_indices = @transform_1, window_bounds = array<i64: 64, 1024>}]} {
    %c0 = arith.constant 0 : index
    %c0_0 = arith.constant 0 : index
    %0 = vector.load %arg1[%c0, %c0_0] : memref<64x1024xf32, #tpu.memory_space<vmem>>, vector<64x1024xf32>
    %cst = arith.constant 4.000000e+00 : f32
    %1 = vector.broadcast %cst : f32 to vector<64x1024xf32>
    %2 = arith.mulf %0, %1 : vector<64x1024xf32>
    %c0_1 = arith.constant 0 : index
    %c0_2 = arith.constant 0 : index
    %3 = vector.load %arg2[%c0_1, %c0_2] : memref<64x1024xf32, #tpu.memory_space<vmem>>, vector<64x1024xf32>
    tpu.vector_store %arg2[%c0_1, %c0_2], %2 {strides = array<i32>} : memref<64x1024xf32, #tpu.memory_space<vmem>>, vector<64x1024xf32>,
    return
  }
  func.func @transform_0(%arg0: i32) -> (i32, i32) {
    %c0_i32 = arith.constant 0 : i32
    %c0_i32_0 = arith.constant 0 : i32
    return %arg0, %c0_i32 : i32, i32
  }
  func.func @transform_1(%arg0: i32) -> (i32, i32) {
    %c0_i32 = arith.constant 0 : i32
    %c0_i32_0 = arith.constant 0 : i32
    return %arg0, %c0_i32 : i32, i32
  }
}

</mosaic_0001>

<llo_original>
// kernel: tpu_custom_call.1
$region0: #{tpu_custom_call.1}
  #allocation0 [shape = 'u32[]', space=smem, size = 0x4, offset = 0x4, fixed_abs, tag = 'smem constant byte address 0x4 - core index']
  #allocation1 [shape = 'u32[144,128]{1,0:T(1,128)}', space=vmem, size = 0x12000, scoped, tag = 'internal scratch']
  %s0 = inlined_call_operand.hbm [shape: f32[64,1024], index: 0, kind: input, shape index: {}]
  %s1 = inlined_call_operand.hbm [shape: f32[64,1024], index: 1, kind: output, shape index: {}]
  %s2 = sld [smem:[#allocation0]]
  $region18: #{tpu_custom_call.1} parent=0
    _
  %s4 = ssub.s32 1, %s2
  %s5 = scalar_select 0, %s4, %s2
  $region1: #{tpu_custom_call.1} parent=0
    #allocation2 [shape = 'u8[262144]{0}', space=vmem, size = 0x40000, scoped, tag = 'input window, operand 0, single buffered']
    #allocation3 [shape = 's32[1]{0}', space=sflag, size = 0x4, scoped, tag = 'scoped memory for tpu_custom_call.1']
    #allocation4 [shape = 's32[1]{0}', space=sflag, size = 0x4, scoped, tag = 'scoped memory for tpu_custom_call.1']
    #allocation5 [shape = 'u8[262144]{0}', space=vmem, size = 0x40000, scoped, tag = 'output window, operand 0, single buffered']
    %6 = vsyncpa [#allocation3], 0
    %7 = vsyncpa [#allocation4], 0
    // Predicated region
    $region2: #{tpu_custom_call.1} parent=1 // pred_check
      _
    $region3: #{tpu_custom_call.1} parent=1 // pred_check_branch
      %9 = sbr.rel (0) target = $region5
    $region4: #{tpu_custom_call.1} parent=1 // pred_region
      %s11 = ssub.s32 8192, 8192
      %12 = vsyncadd [#allocation3], %s11
      %s13 = sshll.u32 [#allocation2], 4
      %s14 = int_to_ptr.vmem [resolvable:$true] %s13
      %19 = dma.hbm_to_vmem [thread:$0]  %s0, 8192, %s14, [#allocation3], 1024, 1024, 64
    $region5: #{tpu_custom_call.1} parent=1 // pred_fallthru
      _
    // Predicated region
    $region6: #{tpu_custom_call.1} parent=1 // pred_check
      _
    $region7: #{tpu_custom_call.1} parent=1 // pred_check_branch
      %21 = sbr.rel (0) target = $region9
    $region8: #{tpu_custom_call.1} parent=1 // pred_region
      %22 = dma.done [#allocation3], 8192
    $region9: #{tpu_custom_call.1} parent=1 // pred_fallthru
      _
    %v23 = vld [vmem:[#allocation2] sm:$0xff]
    %v24 = vld [vmem:[#allocation2 + $0x8] sm:$0xff]
    %v25 = vld [vmem:[#allocation2 + $0x10] sm:$0xff]
    %v26 = vld [vmem:[#allocation2 + $0x18] sm:$0xff]
    %v27 = vld [vmem:[#allocation2 + $0x20] sm:$0xff]
    %v28 = vld [vmem:[#allocation2 + $0x28] sm:$0xff]
    %v29 = vld [vmem:[#allocation2 + $0x30] sm:$0xff]
    %v30 = vld [vmem:[#allocation2 + $0x38] sm:$0xff]
    %v31 = vld [vmem:[#allocation2 + $0x40] sm:$0xff]
    %v32 = vld [vmem:[#allocation2 + $0x48] sm:$0xff]
    %v33 = vld [vmem:[#allocation2 + $0x50] sm:$0xff]
    %v34 = vld [vmem:[#allocation2 + $0x58] sm:$0xff]
    %v35 = vld [vmem:[#allocation2 + $0x60] sm:$0xff]
    %v36 = vld [vmem:[#allocation2 + $0x68] sm:$0xff]
    %v37 = vld [vmem:[#allocation2 + $0x70] sm:$0xff]
    %v38 = vld [vmem:[#allocation2 + $0x78] sm:$0xff]
    %v39 = vld [vmem:[#allocation2 + $0x80] sm:$0xff]
    %v40 = vld [vmem:[#allocation2 + $0x88] sm:$0xff]
    %v41 = vld [vmem:[#allocation2 + $0x90] sm:$0xff]
    %v42 = vld [vmem:[#allocation2 + $0x98] sm:$0xff]
    %v43 = vld [vmem:[#allocation2 + $0xa0] sm:$0xff]
    %v44 = vld [vmem:[#allocation2 + $0xa8] sm:$0xff]
    %v45 = vld [vmem:[#allocation2 + $0xb0] sm:$0xff]
    %v46 = vld [vmem:[#allocation2 + $0xb8] sm:$0xff]
    %v47 = vld [vmem:[#allocation2 + $0xc0] sm:$0xff]
    %v48 = vld [vmem:[#allocation2 + $0xc8] sm:$0xff]
    %v49 = vld [vmem:[#allocation2 + $0xd0] sm:$0xff]
    %v50 = vld [vmem:[#allocation2 + $0xd8] sm:$0xff]
    %v51 = vld [vmem:[#allocation2 + $0xe0] sm:$0xff]
    %v52 = vld [vmem:[#allocation2 + $0xe8] sm:$0xff]
    %v53 = vld [vmem:[#allocation2 + $0xf0] sm:$0xff]
    %v54 = vld [vmem:[#allocation2 + $0xf8] sm:$0xff]
    %v55 = vld [vmem:[#allocation2 + $0x100] sm:$0xff]
    %v56 = vld [vmem:[#allocation2 + $0x108] sm:$0xff]
    %v57 = vld [vmem:[#allocation2 + $0x110] sm:$0xff]
    %v58 = vld [vmem:[#allocation2 + $0x118] sm:$0xff]
    %v59 = vld [vmem:[#allocation2 + $0x120] sm:$0xff]
    %v60 = vld [vmem:[#allocation2 + $0x128] sm:$0xff]
    %v61 = vld [vmem:[#allocation2 + $0x130] sm:$0xff]
    %v62 = vld [vmem:[#allocation2 + $0x138] sm:$0xff]
    %v63 = vld [vmem:[#allocation2 + $0x140] sm:$0xff]
    %v64 = vld [vmem:[#allocation2 + $0x148] sm:$0xff]
    %v65 = vld [vmem:[#allocation2 + $0x150] sm:$0xff]
    %v66 = vld [vmem:[#allocation2 + $0x158] sm:$0xff]
    %v67 = vld [vmem:[#allocation2 + $0x160] sm:$0xff]
    %v68 = vld [vmem:[#allocation2 + $0x168] sm:$0xff]
    %v69 = vld [vmem:[#allocation2 + $0x170] sm:$0xff]
    %v70 = vld [vmem:[#allocation2 + $0x178] sm:$0xff]
    %v71 = vld [vmem:[#allocation2 + $0x180] sm:$0xff]
    %v72 = vld [vmem:[#allocation2 + $0x188] sm:$0xff]
    %v73 = vld [vmem:[#allocation2 + $0x190] sm:$0xff]
    %v74 = vld [vmem:[#allocation2 + $0x198] sm:$0xff]
    %v75 = vld [vmem:[#allocation2 + $0x1a0] sm:$0xff]
    %v76 = vld [vmem:[#allocation2 + $0x1a8] sm:$0xff]
    %v77 = vld [vmem:[#allocation2 + $0x1b0] sm:$0xff]
    %v78 = vld [vmem:[#allocation2 + $0x1b8] sm:$0xff]
    %v79 = vld [vmem:[#allocation2 + $0x1c0] sm:$0xff]
    %v80 = vld [vmem:[#allocation2 + $0x1c8] sm:$0xff]
    %v81 = vld [vmem:[#allocation2 + $0x1d0] sm:$0xff]
    %v82 = vld [vmem:[#allocation2 + $0x1d8] sm:$0xff]
    %v83 = vld [vmem:[#allocation2 + $0x1e0] sm:$0xff]
    %v84 = vld [vmem:[#allocation2 + $0x1e8] sm:$0xff]
    %v85 = vld [vmem:[#allocation2 + $0x1f0] sm:$0xff]
    %v86 = vld [vmem:[#allocation2 + $0x1f8] sm:$0xff]
    %v87 = vmul.f32 %v23, 4.0
    %v88 = vmul.f32 %v24, 4.0
    %v89 = vmul.f32 %v25, 4.0
    %v90 = vmul.f32 %v26, 4.0
    %v91 = vmul.f32 %v27, 4.0
    %v92 = vmul.f32 %v28, 4.0
    %v93 = vmul.f32 %v29, 4.0
    %v94 = vmul.f32 %v30, 4.0
    %v95 = vmul.f32 %v31, 4.0
    %v96 = vmul.f32 %v32, 4.0
    %v97 = vmul.f32 %v33, 4.0
    %v98 = vmul.f32 %v34, 4.0
    %v99 = vmul.f32 %v35, 4.0
    %v100 = vmul.f32 %v36, 4.0
    %v101 = vmul.f32 %v37, 4.0
    %v102 = vmul.f32 %v38, 4.0
    %v103 = vmul.f32 %v39, 4.0
    %v104 = vmul.f32 %v40, 4.0
    %v105 = vmul.f32 %v41, 4.0
    %v106 = vmul.f32 %v42, 4.0
    %v107 = vmul.f32 %v43, 4.0
    %v108 = vmul.f32 %v44, 4.0
    %v109 = vmul.f32 %v45, 4.0
    %v110 = vmul.f32 %v46, 4.0
    %v111 = vmul.f32 %v47, 4.0
    %v112 = vmul.f32 %v48, 4.0
    %v113 = vmul.f32 %v49, 4.0
    %v114 = vmul.f32 %v50, 4.0
    %v115 = vmul.f32 %v51, 4.0
    %v116 = vmul.f32 %v52, 4.0
    %v117 = vmul.f32 %v53, 4.0
    %v118 = vmul.f32 %v54, 4.0
    %v119 = vmul.f32 %v55, 4.0
    %v120 = vmul.f32 %v56, 4.0
    %v121 = vmul.f32 %v57, 4.0
    %v122 = vmul.f32 %v58, 4.0
    %v123 = vmul.f32 %v59, 4.0
    %v124 = vmul.f32 %v60, 4.0
    %v125 = vmul.f32 %v61, 4.0
    %v126 = vmul.f32 %v62, 4.0
    %v127 = vmul.f32 %v63, 4.0
    %v128 = vmul.f32 %v64, 4.0
    %v129 = vmul.f32 %v65, 4.0
    %v130 = vmul.f32 %v66, 4.0
    %v131 = vmul.f32 %v67, 4.0
    %v132 = vmul.f32 %v68, 4.0
    %v133 = vmul.f32 %v69, 4.0
    %v134 = vmul.f32 %v70, 4.0
    %v135 = vmul.f32 %v71, 4.0
    %v136 = vmul.f32 %v72, 4.0
    %v137 = vmul.f32 %v73, 4.0
    %v138 = vmul.f32 %v74, 4.0
    %v139 = vmul.f32 %v75, 4.0
    %v140 = vmul.f32 %v76, 4.0
    %v141 = vmul.f32 %v77, 4.0
    %v142 = vmul.f32 %v78, 4.0
    %v143 = vmul.f32 %v79, 4.0
    %v144 = vmul.f32 %v80, 4.0
    %v145 = vmul.f32 %v81, 4.0
    %v146 = vmul.f32 %v82, 4.0
    %v147 = vmul.f32 %v83, 4.0
    %v148 = vmul.f32 %v84, 4.0
    %v149 = vmul.f32 %v85, 4.0
    %v150 = vmul.f32 %v86, 4.0
    %151 = vst [vmem:[#allocation5] sm:$0xff] %v87
    %152 = vst [vmem:[#allocation5 + $0x8] sm:$0xff] %v88
    %153 = vst [vmem:[#allocation5 + $0x10] sm:$0xff] %v89
    %154 = vst [vmem:[#allocation5 + $0x18] sm:$0xff] %v90
    %155 = vst [vmem:[#allocation5 + $0x20] sm:$0xff] %v91
    %156 = vst [vmem:[#allocation5 + $0x28] sm:$0xff] %v92
    %157 = vst [vmem:[#allocation5 + $0x30] sm:$0xff] %v93
    %158 = vst [vmem:[#allocation5 + $0x38] sm:$0xff] %v94
    %159 = vst [vmem:[#allocation5 + $0x40] sm:$0xff] %v95
    %160 = vst [vmem:[#allocation5 + $0x48] sm:$0xff] %v96
    %161 = vst [vmem:[#allocation5 + $0x50] sm:$0xff] %v97
    %162 = vst [vmem:[#allocation5 + $0x58] sm:$0xff] %v98
    %163 = vst [vmem:[#allocation5 + $0x60] sm:$0xff] %v99
    %164 = vst [vmem:[#allocation5 + $0x68] sm:$0xff] %v100
    %165 = vst [vmem:[#allocation5 + $0x70] sm:$0xff] %v101
    %166 = vst [vmem:[#allocation5 + $0x78] sm:$0xff] %v102
    %167 = vst [vmem:[#allocation5 + $0x80] sm:$0xff] %v103
    %168 = vst [vmem:[#allocation5 + $0x88] sm:$0xff] %v104
    %169 = vst [vmem:[#allocation5 + $0x90] sm:$0xff] %v105
    %170 = vst [vmem:[#allocation5 + $0x98] sm:$0xff] %v106
    %171 = vst [vmem:[#allocation5 + $0xa0] sm:$0xff] %v107
    %172 = vst [vmem:[#allocation5 + $0xa8] sm:$0xff] %v108
    %173 = vst [vmem:[#allocation5 + $0xb0] sm:$0xff] %v109
    %174 = vst [vmem:[#allocation5 + $0xb8] sm:$0xff] %v110
    %175 = vst [vmem:[#allocation5 + $0xc0] sm:$0xff] %v111
    %176 = vst [vmem:[#allocation5 + $0xc8] sm:$0xff] %v112
    %177 = vst [vmem:[#allocation5 + $0xd0] sm:$0xff] %v113
    %178 = vst [vmem:[#allocation5 + $0xd8] sm:$0xff] %v114
    %179 = vst [vmem:[#allocation5 + $0xe0] sm:$0xff] %v115
    %180 = vst [vmem:[#allocation5 + $0xe8] sm:$0xff] %v116
    %181 = vst [vmem:[#allocation5 + $0xf0] sm:$0xff] %v117
    %182 = vst [vmem:[#allocation5 + $0xf8] sm:$0xff] %v118
    %183 = vst [vmem:[#allocation5 + $0x100] sm:$0xff] %v119
    %184 = vst [vmem:[#allocation5 + $0x108] sm:$0xff] %v120
    %185 = vst [vmem:[#allocation5 + $0x110] sm:$0xff] %v121
    %186 = vst [vmem:[#allocation5 + $0x118] sm:$0xff] %v122
    %187 = vst [vmem:[#allocation5 + $0x120] sm:$0xff] %v123
    %188 = vst [vmem:[#allocation5 + $0x128] sm:$0xff] %v124
    %189 = vst [vmem:[#allocation5 + $0x130] sm:$0xff] %v125
    %190 = vst [vmem:[#allocation5 + $0x138] sm:$0xff] %v126
    %191 = vst [vmem:[#allocation5 + $0x140] sm:$0xff] %v127
    %192 = vst [vmem:[#allocation5 + $0x148] sm:$0xff] %v128
    %193 = vst [vmem:[#allocation5 + $0x150] sm:$0xff] %v129
    %194 = vst [vmem:[#allocation5 + $0x158] sm:$0xff] %v130
    %195 = vst [vmem:[#allocation5 + $0x160] sm:$0xff] %v131
    %196 = vst [vmem:[#allocation5 + $0x168] sm:$0xff] %v132
    %197 = vst [vmem:[#allocation5 + $0x170] sm:$0xff] %v133
    %198 = vst [vmem:[#allocation5 + $0x178] sm:$0xff] %v134
    %199 = vst [vmem:[#allocation5 + $0x180] sm:$0xff] %v135
    %200 = vst [vmem:[#allocation5 + $0x188] sm:$0xff] %v136
    %201 = vst [vmem:[#allocation5 + $0x190] sm:$0xff] %v137
    %202 = vst [vmem:[#allocation5 + $0x198] sm:$0xff] %v138
    %203 = vst [vmem:[#allocation5 + $0x1a0] sm:$0xff] %v139
    %204 = vst [vmem:[#allocation5 + $0x1a8] sm:$0xff] %v140
    %205 = vst [vmem:[#allocation5 + $0x1b0] sm:$0xff] %v141
    %206 = vst [vmem:[#allocation5 + $0x1b8] sm:$0xff] %v142
    %207 = vst [vmem:[#allocation5 + $0x1c0] sm:$0xff] %v143
    %208 = vst [vmem:[#allocation5 + $0x1c8] sm:$0xff] %v144
    %209 = vst [vmem:[#allocation5 + $0x1d0] sm:$0xff] %v145
    %210 = vst [vmem:[#allocation5 + $0x1d8] sm:$0xff] %v146
    %211 = vst [vmem:[#allocation5 + $0x1e0] sm:$0xff] %v147
    %212 = vst [vmem:[#allocation5 + $0x1e8] sm:$0xff] %v148
    %213 = vst [vmem:[#allocation5 + $0x1f0] sm:$0xff] %v149
    %214 = vst [vmem:[#allocation5 + $0x1f8] sm:$0xff] %v150
    // Predicated region
    $region10: #{tpu_custom_call.1} parent=1 // pred_check
      _
    $region11: #{tpu_custom_call.1} parent=1 // pred_check_branch
      %216 = sbr.rel (0) target = $region13
    $region12: #{tpu_custom_call.1} parent=1 // pred_region
      %s218 = ssub.s32 8192, 8192
      %219 = vsyncadd [#allocation4], %s218
      %s220 = sshll.u32 [#allocation5], 4
      %s221 = int_to_ptr.vmem [resolvable:$true] %s220
      %226 = dma.vmem_to_hbm [thread:$0]  %s221, 8192, %s1, [#allocation4], 1024, 1024, 64
    $region13: #{tpu_custom_call.1} parent=1 // pred_fallthru
      _
    // Predicated region
    $region14: #{tpu_custom_call.1} parent=1 // pred_check
      _
    $region15: #{tpu_custom_call.1} parent=1 // pred_check_branch
      %228 = sbr.rel (0) target = $region17
    $region16: #{tpu_custom_call.1} parent=1 // pred_region
      %229 = dma.done [#allocation4], 8192
    $region17: #{tpu_custom_call.1} parent=1 // pred_fallthru
      _
    %230 = vsyncpa [#allocation3], 1
    %231 = vsyncpa [#allocation4], 1

</llo_original>
